<compile_context>
chip_gen: v6e
topology: v6e:2x2x1
jax: 0.10.0
libtpu: 0.0.40
codegen_flags: <defaults>
</compile_context>

<pallas_src>
import functools

import jax
import jax.numpy as jnp
from jax.experimental import pallas as pl
from jax.experimental.pallas import tpu as pltpu

NEG_INF = -1000000000.0


def attflat_kernel(x_ref, bias_ref, w1_ref, b1_ref, w2_ref, b2_ref,
                   wm_ref, bm_ref, out_ref, *, glimpses, hidden, seq, tb):
    x2d = x_ref[...]                                     # [TB*S, H]  (bf16 compute dtype)

    # --- MLP: Linear(H -> MID) -> ReLU -> dropout (identity at eval) -> Linear(MID -> G)
    h = jnp.dot(x2d, w1_ref[...], preferred_element_type=jnp.float32) + b1_ref[...]
    h = jnp.maximum(h, 0.0)                              # [TB*S, MID] f32
    # TODO(synk): dropout omitted (inference / eval-mode semantics).
    att = jnp.dot(h, w2_ref[...], preferred_element_type=jnp.float32) + b2_ref[...]  # [TB*S, G]

    # --- additive 0 / -1e9 mask bias, lane-broadcast over the G glimpses.
    att = att + bias_ref[...]                            # [TB*S, G] f32

    # --- softmax over the sequence axis (torch dim=1), in the [TB, S, G] view.
    #     With S == 8 this reshape is a pure re-tiling of the sublane axis (free).
    att3 = att.reshape(tb, seq, glimpses)
    att3 = att3 - jnp.max(att3, axis=1, keepdims=True)
    e = jnp.exp(att3)
    p = e * pl.reciprocal(jnp.sum(e, axis=1, keepdims=True), approx=True)   # [TB, S, G] f32

    # --- glimpse pooling on VPU/XLU (keeps the MXU free for the big matmuls):
    #     pooled_g[b, :] = sum_s p[b, s, g] * x[b, s, :]
    x3 = x2d.astype(jnp.float32).reshape(tb, seq, hidden)          # free re-tiling in f32
    pooled = [jnp.sum(p[:, :, g:g + 1] * x3, axis=1) for g in range(glimpses)]
    pooled2d = jnp.concatenate(pooled, axis=1)                     # [TB, G*H], lane-dense

    # --- fused linear_merge: single K = G*H matmul, lane-dense (tb, OUT_P) output.
    out = jnp.dot(pooled2d.astype(wm_ref.dtype), wm_ref[...],
                  preferred_element_type=jnp.float32) + bm_ref[...]
    out_ref[...] = out.astype(out_ref.dtype)


def attflat(x, x_mask, params, *, glimpses, flat_out_size, batch_tile=512,
            compute_dtype=jnp.bfloat16):
    """x: [B, S, H] float; x_mask: [B, 1, 1, S] bool (True = padded token)."""
    B, S, H = x.shape
    mid = params["w1"].shape[1]
    out_p = ((flat_out_size + 127) // 128) * 128         # lane-dense output width

    # --- batch tile: whole batch if it fits, else a multiple of 8 so the (TB, OUT_P)
    #     output block and all (TB*S, *) input blocks are sublane-aligned.
    if B <= batch_tile:
        tb, pb = B, B
    else:
        tb = max(8, (batch_tile // 8) * 8)
        pb = ((B + tb - 1) // tb) * tb

    # --- additive mask bias (0 real / -1e9 padded), 2D [pb*S, 1] f32.
    bias = jnp.where(x_mask.reshape(B, S), NEG_INF, 0.0).astype(jnp.float32)
    if pb != B:
        x = jnp.pad(x, ((0, pb - B), (0, 0), (0, 0)))
        bias = jnp.pad(bias, ((0, pb - B), (0, 0)))
    bias = bias.reshape(pb * S, 1)

    # --- large operands in bf16 (f32 accumulation in-kernel); x pre-flattened.
    x2d = x.reshape(pb * S, H).astype(compute_dtype)
    w1 = params["w1"].astype(compute_dtype)
    wm = params["wm"].astype(compute_dtype)
    w2 = params["w2"].astype(jnp.float32)                # tiny logit matmul kept f32
    b1 = params["b1"].astype(jnp.float32)
    b2 = params["b2"].astype(jnp.float32)
    bm = params["bm"].astype(jnp.float32)
    if out_p != flat_out_size:
        wm = jnp.pad(wm, ((0, 0), (0, out_p - flat_out_size)))
        bm = jnp.pad(bm, ((0, 0), (0, out_p - flat_out_size)))

    kernel = functools.partial(attflat_kernel, glimpses=glimpses, hidden=H,
                               seq=S, tb=tb)

    out = pl.pallas_call(
        kernel,
        out_shape=jax.ShapeDtypeStruct((pb, out_p), jnp.float32),
        grid_spec=pltpu.PrefetchScalarGridSpec(
            num_scalar_prefetch=0,
            grid=(pb // tb,),
            in_specs=[
                pl.BlockSpec((tb * S, H), lambda b: (b, 0)),                # x   [pb*S, H]
                pl.BlockSpec((tb * S, 1), lambda b: (b, 0)),                # mask bias
                pl.BlockSpec((H, mid), lambda b: (0, 0)),                   # W1
                pl.BlockSpec((1, mid), lambda b: (0, 0)),                   # b1
                pl.BlockSpec((mid, glimpses), lambda b: (0, 0)),            # W2
                pl.BlockSpec((1, glimpses), lambda b: (0, 0)),              # b2
                pl.BlockSpec((H * glimpses, out_p), lambda b: (0, 0)),      # Wm (padded cols)
                pl.BlockSpec((1, out_p), lambda b: (0, 0)),                 # bm (padded cols)
            ],
            out_specs=pl.BlockSpec((tb, out_p), lambda b: (b, 0)),
        ),
        compiler_params=pltpu.CompilerParams(dimension_semantics=("parallel",)),
    )(x2d, bias, w1, b1, w2, b2, wm, bm)
    return out[:B, :flat_out_size]


def attflat_reference(x, x_mask, params, *, glimpses):
    """Plain-JAX reference mirroring the PyTorch forward exactly (f32)."""
    h = jnp.maximum(jnp.einsum("bsh,hm->bsm", x, params["w1"]) + params["b1"][0], 0.0)
    att = jnp.einsum("bsm,mg->bsg", h, params["w2"]) + params["b2"][0]
    m = x_mask.reshape(x.shape[0], x.shape[1], 1)
    att = jnp.where(m, NEG_INF, att)
    att = jax.nn.softmax(att, axis=1)
    att_list = [jnp.sum(att[:, :, i:i + 1] * x, axis=1) for i in range(glimpses)]
    x_atted = jnp.concatenate(att_list, axis=1)
    return x_atted @ params["wm"] + params["bm"][0]


def _bf16_rounded_operands(x, params):
    """Round the operands the kernel casts to bf16, for a fair reference comparison."""
    rnd = lambda t: t.astype(jnp.bfloat16).astype(jnp.float32)
    pr = dict(params)
    pr["w1"] = rnd(params["w1"])
    pr["wm"] = rnd(params["wm"])
    return rnd(x), pr


if __name__ == "__main__":
    # Config consistent with the module:
    #   HIDDEN_SIZE=32, FLAT_MLP_SIZE=64, FLAT_GLIMPSES=2, FLAT_OUT_SIZE=64
    S, H, MID, G, OUT = 8, 32, 64, 2, 64

    key = jax.random.PRNGKey(0)
    k1, k2, k3, k4, kx1, kx2 = jax.random.split(key, 6)

    params = {
        "w1": jax.random.normal(k1, (H, MID), jnp.float32) / jnp.sqrt(H),
        "b1": jnp.zeros((1, MID), jnp.float32) + 0.01,
        "w2": jax.random.normal(k2, (MID, G), jnp.float32) / jnp.sqrt(MID),
        "b2": jnp.zeros((1, G), jnp.float32),
        "wm": jax.random.normal(k3, (H * G, OUT), jnp.float32) / jnp.sqrt(H * G),
        "bm": jax.random.normal(k4, (1, OUT), jnp.float32) * 0.01,
    }

    # Test 1: small batch (single batch tile, tb == B).
    B = 2
    x = jax.random.normal(kx1, (B, S, H), dtype=jnp.float32)
    pad = jnp.zeros((B, S), dtype=bool).at[1, S - 3:].set(True)    # last 3 tokens padded
    x_mask = pad[:, None, None, :]
    out = jax.block_until_ready(attflat(x, x_mask, params, glimpses=G, flat_out_size=OUT))
    x_r, params_r = _bf16_rounded_operands(x, params)
    ref = attflat_reference(x_r, x_mask, params_r, glimpses=G)
    assert out.shape == (B, OUT)
    # bf16 matmul operands + approx reciprocal -> compare against a bf16-rounded reference.
    assert jnp.allclose(out, ref, atol=2e-2, rtol=2e-2), "mismatch vs reference (B=2)"

    # Test 2: batch larger than the tile (exercises batch tiling + padding path).
    B2 = 12
    x2 = jax.random.normal(kx2, (B2, S, H), dtype=jnp.float32)
    pad2 = jnp.zeros((B2, S), dtype=bool).at[::3, S - 2:].set(True)
    x_mask2 = pad2[:, None, None, :]
    out2 = jax.block_until_ready(
        attflat(x2, x_mask2, params, glimpses=G, flat_out_size=OUT, batch_tile=8))
    x2_r, params_r = _bf16_rounded_operands(x2, params)
    ref2 = attflat_reference(x2_r, x_mask2, params_r, glimpses=G)
    assert out2.shape == (B2, OUT)
    assert jnp.allclose(out2, ref2, atol=2e-2, rtol=2e-2), "mismatch vs reference (B=12, tiled)"

    # Test 3: same batch with the default (large) tile -> single full-batch block.
    out3 = jax.block_until_ready(
        attflat(x2, x_mask2, params, glimpses=G, flat_out_size=OUT))
    assert jnp.allclose(out3, ref2, atol=2e-2, rtol=2e-2), "mismatch vs reference (B=12, full)"

    print("KERNEL_OK")
</pallas_src>

<mosaic_0001>
module attributes {stable_mosaic.version = 11 : i64} {
  func.func @attflat_kernel(%arg0: i32, %arg1: memref<16x32xbf16, #tpu.memory_space<vmem>>, %arg2: memref<16x1xf32, #tpu.memory_space<vmem>>, %arg3: memref<32x64xbf16, #tpu.memory_space<vmem>>, %arg4: memref<1x64xf32, #tpu.memory_space<vmem>>, %arg5: memref<64x2xf32, #tpu.memory_space<vmem>>, %arg6: memref<1x2xf32, #tpu.memory_space<vmem>>, %arg7: memref<64x128xbf16, #tpu.memory_space<vmem>>, %arg8: memref<1x128xf32, #tpu.memory_space<vmem>>, %arg9: memref<2x128xf32, #tpu.memory_space<vmem>>) attributes {dimension_semantics = [#tpu.dimension_semantics<parallel>], iteration_bounds = array<i64: 1>, scalar_prefetch = 0 : i64, scratch_operands = 0 : i64, tpu.core_type = #tpu.core_type<tc>, window_params = [{transform_indices = @transform_0, window_bounds = array<i64: 16, 32>}, {transform_indices = @transform_1, window_bounds = array<i64: 16, 1>}, {pipeline_mode = #tpu.pipeline_mode<synchronous>, transform_indices = @transform_2, window_bounds = array<i64: 32, 64>}, {pipeline_mode = #tpu.pipeline_mode<synchronous>, transform_indices = @transform_3, window_bounds = array<i64: 1, 64>}, {pipeline_mode = #tpu.pipeline_mode<synchronous>, transform_indices = @transform_4, window_bounds = array<i64: 64, 2>}, {pipeline_mode = #tpu.pipeline_mode<synchronous>, transform_indices = @transform_5, window_bounds = array<i64: 1, 2>}, {pipeline_mode = #tpu.pipeline_mode<synchronous>, transform_indices = @transform_6, window_bounds = array<i64: 64, 128>}, {pipeline_mode = #tpu.pipeline_mode<synchronous>, transform_indices = @transform_7, window_bounds = array<i64: 1, 128>}, {transform_indices = @transform_8, window_bounds = array<i64: 2, 128>}]} {
    %c0 = arith.constant 0 : index
    %c0_0 = arith.constant 0 : index
    %0 = vector.load %arg1[%c0, %c0_0] : memref<16x32xbf16, #tpu.memory_space<vmem>>, vector<16x32xbf16>
    %c0_1 = arith.constant 0 : index
    %c0_2 = arith.constant 0 : index
    %1 = vector.load %arg3[%c0_1, %c0_2] : memref<32x64xbf16, #tpu.memory_space<vmem>>, vector<32x64xbf16>
    %cst = arith.constant dense<0.000000e+00> : vector<16x64xf32>
    %2 = tpu.matmul %0, %1, %cst {dimension_numbers = #tpu.dot_dimension_numbers<[1], [0], [0], [1], [0, 0, 1, 1], [], []>} : vector<16x32xbf16>, vector<32x64xbf16>, vector<16x64xf32> -> vector<16x64xf32>
    %c0_3 = arith.constant 0 : index
    %c0_4 = arith.constant 0 : index
    %3 = vector.load %arg4[%c0_3, %c0_4] : memref<1x64xf32, #tpu.memory_space<vmem>>, vector<1x64xf32>
    %4 = vector.broadcast %3 : vector<1x64xf32> to vector<16x64xf32>
    %5 = arith.addf %2, %4 : vector<16x64xf32>
    %cst_5 = arith.constant 0.000000e+00 : f32
    %6 = vector.broadcast %cst_5 : f32 to vector<16x64xf32>
    %7 = arith.maximumf %5, %6 : vector<16x64xf32>
    %c0_6 = arith.constant 0 : index
    %c0_7 = arith.constant 0 : index
    %8 = vector.load %arg5[%c0_6, %c0_7] : memref<64x2xf32, #tpu.memory_space<vmem>>, vector<64x2xf32>
    %cst_8 = arith.constant dense<0.000000e+00> : vector<16x2xf32>
    %9 = tpu.matmul %7, %8, %cst_8 {dimension_numbers = #tpu.dot_dimension_numbers<[1], [0], [0], [1], [0, 0, 1, 1], [], []>} : vector<16x64xf32>, vector<64x2xf32>, vector<16x2xf32> -> vector<16x2xf32>
    %c0_9 = arith.constant 0 : index
    %c0_10 = arith.constant 0 : index
    %10 = vector.load %arg6[%c0_9, %c0_10] : memref<1x2xf32, #tpu.memory_space<vmem>>, vector<1x2xf32>
    %11 = vector.broadcast %10 : vector<1x2xf32> to vector<16x2xf32>
    %12 = arith.addf %9, %11 : vector<16x2xf32>
    %c0_11 = arith.constant 0 : index
    %c0_12 = arith.constant 0 : index
    %13 = vector.load %arg2[%c0_11, %c0_12] : memref<16x1xf32, #tpu.memory_space<vmem>>, vector<16x1xf32>
    %14 = vector.broadcast %13 : vector<16x1xf32> to vector<16x2xf32>
    %15 = arith.addf %12, %14 : vector<16x2xf32>
    %16 = vector.shape_cast %15 : vector<16x2xf32> to vector<2x8x2xf32>
    %cst_13 = arith.constant dense<0xFF800000> : vector<2x2xf32>
    %17 = vector.multi_reduction <maximumf>, %16, %cst_13 [1] : vector<2x8x2xf32> to vector<2x2xf32>
    %18 = vector.shape_cast %17 : vector<2x2xf32> to vector<2x1x2xf32>
    %19 = vector.broadcast %18 : vector<2x1x2xf32> to vector<2x8x2xf32>
    %20 = arith.subf %16, %19 : vector<2x8x2xf32>
    %21 = math.exp %20 : vector<2x8x2xf32>
    %cst_14 = arith.constant dense<0.000000e+00> : vector<2x2xf32>
    %22 = vector.multi_reduction <add>, %21, %cst_14 [1] : vector<2x8x2xf32> to vector<2x2xf32>
    %23 = vector.shape_cast %22 : vector<2x2xf32> to vector<2x1x2xf32>
    %24 = tpu.reciprocal %23 {approx = true} : vector<2x1x2xf32> -> vector<2x1x2xf32>
    %25 = vector.broadcast %24 : vector<2x1x2xf32> to vector<2x8x2xf32>
    %26 = arith.mulf %21, %25 : vector<2x8x2xf32>
    %27 = arith.extf %0 : vector<16x32xbf16> to vector<16x32xf32>
    %28 = vector.shape_cast %27 : vector<16x32xf32> to vector<2x8x32xf32>
    %29 = vector.extract_strided_slice %26 {offsets = [0, 0, 0], sizes = [2, 8, 1], strides = [1, 1, 1]} : vector<2x8x2xf32> to vector<2x8x1xf32>
    %30 = vector.broadcast %29 : vector<2x8x1xf32> to vector<2x8x32xf32>
    %31 = arith.mulf %30, %28 : vector<2x8x32xf32>
    %cst_15 = arith.constant dense<0.000000e+00> : vector<2x32xf32>
    %32 = vector.multi_reduction <add>, %31, %cst_15 [1] : vector<2x8x32xf32> to vector<2x32xf32>
    %33 = vector.extract_strided_slice %26 {offsets = [0, 0, 1], sizes = [2, 8, 1], strides = [1, 1, 1]} : vector<2x8x2xf32> to vector<2x8x1xf32>
    %34 = vector.broadcast %33 : vector<2x8x1xf32> to vector<2x8x32xf32>
    %35 = arith.mulf %34, %28 : vector<2x8x32xf32>
    %cst_16 = arith.constant dense<0.000000e+00> : vector<2x32xf32>
    %36 = vector.multi_reduction <add>, %35, %cst_16 [1] : vector<2x8x32xf32> to vector<2x32xf32>
    %37 = tpu.concatenate %32, %36 in 1 : vector<2x32xf32>, vector<2x32xf32> -> vector<2x64xf32>
    %38 = arith.truncf %37 : vector<2x64xf32> to vector<2x64xbf16>
    %c0_17 = arith.constant 0 : index
    %c0_18 = arith.constant 0 : index
    %39 = vector.load %arg7[%c0_17, %c0_18] : memref<64x128xbf16, #tpu.memory_space<vmem>>, vector<64x128xbf16>
    %cst_19 = arith.constant dense<0.000000e+00> : vector<2x128xf32>
    %40 = tpu.matmul %38, %39, %cst_19 {dimension_numbers = #tpu.dot_dimension_numbers<[1], [0], [0], [1], [0, 0, 1, 1], [], []>} : vector<2x64xbf16>, vector<64x128xbf16>, vector<2x128xf32> -> vector<2x128xf32>
    %c0_20 = arith.constant 0 : index
    %c0_21 = arith.constant 0 : index
    %41 = vector.load %arg8[%c0_20, %c0_21] : memref<1x128xf32, #tpu.memory_space<vmem>>, vector<1x128xf32>
    %42 = vector.broadcast %41 : vector<1x128xf32> to vector<2x128xf32>
    %43 = arith.addf %40, %42 : vector<2x128xf32>
    %c0_22 = arith.constant 0 : index
    %c0_23 = arith.constant 0 : index
    %44 = vector.load %arg9[%c0_22, %c0_23] : memref<2x128xf32, #tpu.memory_space<vmem>>, vector<2x128xf32>
    tpu.vector_store %arg9[%c0_22, %c0_23], %43 {strides = array<i32>} : memref<2x128xf32, #tpu.memory_space<vmem>>, vector<2x128xf32>,
    return
  }
  func.func @transform_0(%arg0: i32) -> (i32, i32) {
    %c0_i32 = arith.constant 0 : i32
    %c0_i32_0 = arith.constant 0 : i32
    return %arg0, %c0_i32 : i32, i32
  }
  func.func @transform_1(%arg0: i32) -> (i32, i32) {
    %c0_i32 = arith.constant 0 : i32
    %c0_i32_0 = arith.constant 0 : i32
    return %arg0, %c0_i32 : i32, i32
  }
  func.func @transform_2(%arg0: i32) -> (i32, i32) {
    %c0_i32 = arith.constant 0 : i32
    %c0_i32_0 = arith.constant 0 : i32
    %c0_i32_1 = arith.constant 0 : i32
    return %c0_i32, %c0_i32_0 : i32, i32
  }
  func.func @transform_3(%arg0: i32) -> (i32, i32) {
    %c0_i32 = arith.constant 0 : i32
    %c0_i32_0 = arith.constant 0 : i32
    %c0_i32_1 = arith.constant 0 : i32
    return %c0_i32, %c0_i32_0 : i32, i32
  }
  func.func @transform_4(%arg0: i32) -> (i32, i32) {
    %c0_i32 = arith.constant 0 : i32
    %c0_i32_0 = arith.constant 0 : i32
    %c0_i32_1 = arith.constant 0 : i32
    return %c0_i32, %c0_i32_0 : i32, i32
  }
  func.func @transform_5(%arg0: i32) -> (i32, i32) {
    %c0_i32 = arith.constant 0 : i32
    %c0_i32_0 = arith.constant 0 : i32
    %c0_i32_1 = arith.constant 0 : i32
    return %c0_i32, %c0_i32_0 : i32, i32
  }
  func.func @transform_6(%arg0: i32) -> (i32, i32) {
    %c0_i32 = arith.constant 0 : i32
    %c0_i32_0 = arith.constant 0 : i32
    %c0_i32_1 = arith.constant 0 : i32
    return %c0_i32, %c0_i32_0 : i32, i32
  }
  func.func @transform_7(%arg0: i32) -> (i32, i32) {
    %c0_i32 = arith.constant 0 : i32
    %c0_i32_0 = arith.constant 0 : i32
    %c0_i32_1 = arith.constant 0 : i32
    return %c0_i32, %c0_i32_0 : i32, i32
  }
  func.func @transform_8(%arg0: i32) -> (i32, i32) {
    %c0_i32 = arith.constant 0 : i32
    %c0_i32_0 = arith.constant 0 : i32
    return %arg0, %c0_i32 : i32, i32
  }
}

</mosaic_0001>

<llo_original>
// kernel: tpu_custom_call.1
$region0: #{tpu_custom_call.1}
  #allocation0 [shape = 'u32[]', space=smem, size = 0x4, offset = 0x4, fixed_abs, tag = 'smem constant byte address 0x4 - core index']
  #allocation1 [shape = 'u32[144,128]{1,0:T(1,128)}', space=vmem, size = 0x12000, scoped, tag = 'internal scratch']
  %s0 = inlined_call_operand.vmem [shape: bf16[16,32], index: 0, kind: input, shape index: {}]
  %s1 = inlined_call_operand.vmem [shape: f32[16,1], index: 1, kind: input, shape index: {}]
  %s2 = inlined_call_operand.vmem [shape: bf16[32,64], index: 2, kind: input, shape index: {}]
  %s3 = inlined_call_operand.vmem [shape: f32[1,64], index: 3, kind: input, shape index: {}]
  %s4 = inlined_call_operand.vmem [shape: f32[64,2], index: 4, kind: input, shape index: {}]
  %s5 = inlined_call_operand.vmem [shape: f32[1,2], index: 5, kind: input, shape index: {}]
  %s6 = inlined_call_operand.vmem [shape: bf16[64,128], index: 6, kind: input, shape index: {}]
  %s7 = inlined_call_operand.vmem [shape: f32[1,128], index: 7, kind: input, shape index: {}]
  %s8 = inlined_call_operand.hbm [shape: f32[2,128], index: 8, kind: output, shape index: {}]
  %s9 = sld [smem:[#allocation0]]
  $region42: #{tpu_custom_call.1} parent=0
    _
  %s11 = ssub.s32 1, %s9
  %s12 = scalar_select 0, %s11, %s9
  $region1: #{tpu_custom_call.1} parent=0
    #allocation2 [shape = 'u8[1024]{0}', space=vmem, size = 0x400, scoped, tag = 'output window, operand 0, single buffered']
    #allocation3 [shape = 's32[1]{0}', space=sflag, size = 0x4, scoped, tag = 'scoped memory for tpu_custom_call.1']
    %13 = vsyncpa [#allocation3], 0
    // Predicated region
    $region2: #{tpu_custom_call.1} parent=1 // pred_check
      _
    $region3: #{tpu_custom_call.1} parent=1 // pred_check_branch
      %15 = sbr.rel (0) target = $region5
    $region4: #{tpu_custom_call.1} parent=1 // pred_region
      _
    $region5: #{tpu_custom_call.1} parent=1 // pred_fallthru
      _
    // Predicated region
    $region6: #{tpu_custom_call.1} parent=1 // pred_check
      _
    $region7: #{tpu_custom_call.1} parent=1 // pred_check_branch
      %17 = sbr.rel (0) target = $region9
    $region8: #{tpu_custom_call.1} parent=1 // pred_region
      _
    $region9: #{tpu_custom_call.1} parent=1 // pred_fallthru
      _
    // Predicated region
    $region10: #{tpu_custom_call.1} parent=1 // pred_check
      _
    $region11: #{tpu_custom_call.1} parent=1 // pred_check_branch
      %19 = sbr.rel (0) target = $region13
    $region12: #{tpu_custom_call.1} parent=1 // pred_region
      _
    $region13: #{tpu_custom_call.1} parent=1 // pred_fallthru
      _
    // Predicated region
    $region14: #{tpu_custom_call.1} parent=1 // pred_check
      _
    $region15: #{tpu_custom_call.1} parent=1 // pred_check_branch
      %21 = sbr.rel (0) target = $region17
    $region16: #{tpu_custom_call.1} parent=1 // pred_region
      _
    $region17: #{tpu_custom_call.1} parent=1 // pred_fallthru
      _
    // Predicated region
    $region18: #{tpu_custom_call.1} parent=1 // pred_check
      _
    $region19: #{tpu_custom_call.1} parent=1 // pred_check_branch
      %23 = sbr.rel (0) target = $region21
    $region20: #{tpu_custom_call.1} parent=1 // pred_region
      _
    $region21: #{tpu_custom_call.1} parent=1 // pred_fallthru
      _
    // Predicated region
    $region22: #{tpu_custom_call.1} parent=1 // pred_check
      _
    $region23: #{tpu_custom_call.1} parent=1 // pred_check_branch
      %25 = sbr.rel (0) target = $region25
    $region24: #{tpu_custom_call.1} parent=1 // pred_region
      _
    $region25: #{tpu_custom_call.1} parent=1 // pred_fallthru
      _
    // Predicated region
    $region26: #{tpu_custom_call.1} parent=1 // pred_check
      _
    $region27: #{tpu_custom_call.1} parent=1 // pred_check_branch
      %27 = sbr.rel (0) target = $region29
    $region28: #{tpu_custom_call.1} parent=1 // pred_region
      _
    $region29: #{tpu_custom_call.1} parent=1 // pred_fallthru
      _
    // Predicated region
    $region30: #{tpu_custom_call.1} parent=1 // pred_check
      _
    $region31: #{tpu_custom_call.1} parent=1 // pred_check_branch
      %29 = sbr.rel (0) target = $region33
    $region32: #{tpu_custom_call.1} parent=1 // pred_region
      _
    $region33: #{tpu_custom_call.1} parent=1 // pred_fallthru
      _
    %v31 = vld [vmem:[%s0] sm:$0xf]
    %v32 = vld [vmem:[%s0 + $0x4] sm:$0xf]
    %v33 = vld [vmem:[%s2] sm:$0xf]
    %v34 = vld [vmem:[%s2 + $0x4] sm:$0xf]
    %v35 = vld [vmem:[%s2 + $0x8] sm:$0xf]
    %v36 = vld [vmem:[%s2 + $0xc] sm:$0xf]
    %v37 = vld [vmem:[%s3] sm:$0x1]
    %v39 = vlaneseq
    %v40 = vshrl.u32 %v39, 7
    %v41 = vsub.s32 0, %v40
    %v42 = vrot.slane %v37, %v41
    %v46 = vunpack.c.l.b16 %v31
    %v47 = vunpack.c.l.b16 %v32
    %v48 = vpack.c.b16 %v47, %v46
    %v53 = vunpack.c.l.b16 %v33
    %v54 = vunpack.c.l.b16 %v34
    %v55 = vunpack.c.l.b16 %v35
    %v56 = vunpack.c.l.b16 %v36
    %v57 = vpack.c.b16 %v54, %v53
    %v58 = vpack.c.b16 %v56, %v55
    %vm61 = vcmask 261120
    %v63 = vsel %vm61, %v48, 0
    %65 = vmatprep.subr.bf16.mxu0 0
    %66 = vmatpush1.bf16.msra.mxu0 0
    %67 = vmatprep.subr.bf16.mxu0 0
    %68 = vmatpush1.bf16.msra.mxu0 0
    %69 = vmatprep.subr.bf16.mxu0 0
    %70 = vmatpush1.bf16.msra.mxu0 0
    %71 = vmatprep.subr.bf16.mxu0 0
    %72 = vmatpush1.bf16.msra.mxu0 0
    %73 = vmatprep.subr.bf16.mxu0 0
    %74 = vmatpush1.bf16.msra.mxu0 0
    %75 = vmatprep.subr.bf16.mxu0 0
    %76 = vmatpush1.bf16.msra.mxu0 0
    %77 = vmatprep.subr.bf16.mxu0 0
    %78 = vmatpush1.bf16.msra.mxu0 %v58
    %79 = vmatprep.subr.bf16.mxu0 0
    %80 = vmatpush1.bf16.msra.mxu0 %v57
    %81 = vmatprep.subr.bf16.mxu0 0
    %82 = vmatpush2.bf16.msra.mxu0 0
    %83 = vmatprep.subr.bf16.mxu0 0
    %84 = vmatpush2.bf16.msra.mxu0 0
    %85 = vmatprep.subr.bf16.mxu0 0
    %86 = vmatpush2.bf16.msra.mxu0 0
    %87 = vmatprep.subr.bf16.mxu0 0
    %88 = vmatpush2.bf16.msra.mxu0 0
    %89 = vmatprep.subr.bf16.mxu0 0
    %90 = vmatpush2.bf16.msra.mxu0 0
    %91 = vmatprep.subr.bf16.mxu0 0
    %92 = vmatpush2.bf16.msra.mxu0 0
    %93 = vmatprep.subr.bf16.mxu0 0
    %94 = vmatpush2.bf16.msra.mxu0 0
    %95 = vmatprep.subr.bf16.mxu0 0
    %96 = vmatpush2.bf16.msra.mxu0 0
    %97 = vmatprep.mubr.bf16.mxu0 0
    %98 = vmatmul.mubr.bf16.gmra.mxu0 %v63
    %v99 = vpop.f32.mrf.mxu0
    %v100 = vadd.f32 %v42, %v99
    %v101 = vpop.f32.mrf.mxu0
    %v102 = vpop.f32.mrf.mxu0
    %v103 = vadd.f32 %v42, %v102
    %v104 = vpop.f32.mrf.mxu0
    %105 = vdwg.mxu0
    %v106 = vmax.f32 %v100, 0.0
    %v107 = vmax.f32 %v103, 0.0
    %v108 = vld [vmem:[%s4] sm:$0xff]
    %v109 = vld [vmem:[%s4 + $0x8] sm:$0xff]
    %v110 = vld [vmem:[%s4 + $0x10] sm:$0xff]
    %v111 = vld [vmem:[%s4 + $0x18] sm:$0xff]
    %v112 = vld [vmem:[%s4 + $0x20] sm:$0xff]
    %v113 = vld [vmem:[%s4 + $0x28] sm:$0xff]
    %v114 = vld [vmem:[%s4 + $0x30] sm:$0xff]
    %v115 = vld [vmem:[%s4 + $0x38] sm:$0xff]
    %v116 = vld [vmem:[%s5] sm:$0x1]
    %v118 = vlaneseq
    %v119 = vshrl.u32 %v118, 7
    %v120 = vsub.s32 0, %v119
    %v121 = vrot.slane %v116, %v120
    %vm123 = vcmask 523264
    %v125 = vsel %vm123, %v106, 0
    %v128 = vsel %vm123, %v107, 0
    %130 = vmatprep.subr.mxu0 0.0
    %131 = vmatpush1.msra.mxu0 0.0
    %132 = vmatprep.subr.mxu0 0.0
    %133 = vmatpush1.msra.mxu0 0.0
    %134 = vmatprep.subr.mxu0 0.0
    %135 = vmatpush1.msra.mxu0 0.0
    %136 = vmatprep.subr.mxu0 0.0
    %137 = vmatpush1.msra.mxu0 0.0
    %138 = vmatprep.subr.mxu0 0.0
    %139 = vmatpush1.msra.mxu0 0.0
    %140 = vmatprep.subr.mxu0 0.0
    %141 = vmatpush1.msra.mxu0 0.0
    %142 = vmatprep.subr.mxu0 0.0
    %143 = vmatpush1.msra.mxu0 0.0
    %144 = vmatprep.subr.mxu0 0.0
    %145 = vmatpush1.msra.mxu0 0.0
    %146 = vmatprep.subr.mxu0 0.0
    %147 = vmatpush1.msra.mxu0 %v115
    %148 = vmatprep.subr.mxu0 0.0
    %149 = vmatpush1.msra.mxu0 %v114
    %150 = vmatprep.subr.mxu0 0.0
    %151 = vmatpush1.msra.mxu0 %v113
    %152 = vmatprep.subr.mxu0 0.0
    %153 = vmatpush1.msra.mxu0 %v112
    %154 = vmatprep.subr.mxu0 0.0
    %155 = vmatpush1.msra.mxu0 %v111
    %156 = vmatprep.subr.mxu0 0.0
    %157 = vmatpush1.msra.mxu0 %v110
    %158 = vmatprep.subr.mxu0 0.0
    %159 = vmatpush1.msra.mxu0 %v109
    %160 = vmatprep.subr.mxu0 0.0
    %161 = vmatpush1.msra.mxu0 %v108
    %162 = vmatprep.subr.mxu0 0.0
    %163 = vmatpush2.msra.mxu0 0.0
    %164 = vmatprep.subr.mxu0 0.0
    %165 = vmatpush2.msra.mxu0 0.0
    %166 = vmatprep.subr.mxu0 0.0
    %167 = vmatpush2.msra.mxu0 0.0
    %168 = vmatprep.subr.mxu0 0.0
    %169 = vmatpush2.msra.mxu0 0.0
    %170 = vmatprep.subr.mxu0 0.0
    %171 = vmatpush2.msra.mxu0 0.0
    %172 = vmatprep.subr.mxu0 0.0
    %173 = vmatpush2.msra.mxu0 0.0
    %174 = vmatprep.subr.mxu0 0.0
    %175 = vmatpush2.msra.mxu0 0.0
    %176 = vmatprep.subr.mxu0 0.0
    %177 = vmatpush2.msra.mxu0 0.0
    %178 = vmatprep.subr.mxu0 0.0
    %179 = vmatpush2.msra.mxu0 0.0
    %180 = vmatprep.subr.mxu0 0.0
    %181 = vmatpush2.msra.mxu0 0.0
    %182 = vmatprep.subr.mxu0 0.0
    %183 = vmatpush2.msra.mxu0 0.0
    %184 = vmatprep.subr.mxu0 0.0
    %185 = vmatpush2.msra.mxu0 0.0
    %186 = vmatprep.subr.mxu0 0.0
    %187 = vmatpush2.msra.mxu0 0.0
    %188 = vmatprep.subr.mxu0 0.0
    %189 = vmatpush2.msra.mxu0 0.0
    %190 = vmatprep.subr.mxu0 0.0
    %191 = vmatpush2.msra.mxu0 0.0
    %192 = vmatprep.subr.mxu0 0.0
    %193 = vmatpush2.msra.mxu0 0.0
    %194 = vmatprep.mubr.f32.mxu0 0.0
    %195 = vmatmul.mubr.f32.gmra.mxu0 %v125
    %v196 = vpop.f32.mrf.mxu0
    %v197 = vadd.f32 %v121, %v196
    %v198 = vpop.f32.mrf.mxu0
    %199 = vmatprep.mubr.f32.mxu0 0.0
    %200 = vmatmul.mubr.f32.gmra.mxu0 %v128
    %v201 = vpop.f32.mrf.mxu0
    %v202 = vadd.f32 %v121, %v201
    %v203 = vpop.f32.mrf.mxu0
    %204 = vdwg.mxu0
    %v205 = vld [vmem:[%s1] sm:$0xff]
    %v206 = vld [vmem:[%s1 + $0x8] sm:$0xff]
    %208 = vset.pattern.permute.xlu0 0
    %209 = vperm.xlu0 %208, %v205
    %v210 = vpop.permute.xlu0 %209
    %213 = vset.pattern.permute.xlu0 0
    %214 = vperm.xlu0 %213, %v206
    %v215 = vpop.permute.xlu0 %214
    %v217 = vadd.f32 %v197, %v210
    %v218 = vadd.f32 %v202, %v215
    %vm219 = vcmask 15360
    %v220 = vsel %vm219, %v217, -inf
    %v221 = vrot.slane %v220, 4
    %v222 = vmax.f32 %v220, %v221
    %v223 = vrot.slane %v222, 2
    %v224 = vmax.f32 %v222, %v223
    %v225 = vrot.slane %v224, 1
    %v226 = vmax.f32 %v224, %v225
    %v227 = vsel %vm219, %v218, -inf
    %v228 = vrot.slane %v227, 4
    %v229 = vmax.f32 %v227, %v228
    %v230 = vrot.slane %v229, 2
    %v231 = vmax.f32 %v229, %v230
    %v232 = vrot.slane %v231, 1
    %v233 = vmax.f32 %v231, %v232
    %v234 = vsub.f32 %v217, %v226
    %v235 = vsub.f32 %v218, %v233
    %v236 = vmul.f32 %v234, 1.442695
    %v237 = vpow.pop %v236
    %v238 = vmul.f32 %v235, 1.442695
    %v239 = vpow.pop %v238
    %v240 = vsel %vm219, %v237, 0.0
    %v241 = vrot.slane %v240, 4
    %v242 = vadd.f32 %v240, %v241
    %v243 = vrot.slane %v242, 2
    %v244 = vadd.f32 %v242, %v243
    %v245 = vrot.slane %v244, 1
    %v246 = vadd.f32 %v244, %v245
    %v247 = vsel %vm219, %v239, 0.0
    %v248 = vrot.slane %v247, 4
    %v249 = vadd.f32 %v247, %v248
    %v250 = vrot.slane %v249, 2
    %v251 = vadd.f32 %v249, %v250
    %v252 = vrot.slane %v251, 1
    %v253 = vadd.f32 %v251, %v252
    %v254 = vrcp.pop %v246
    %v255 = vrcp.pop %v253
    %v256 = vmul.f32 %v237, %v254
    %v257 = vmul.f32 %v239, %v255
    %v258 = vunpack.c.l.bf16 %v31
    %v259 = vunpack.c.l.bf16 %v32
    %261 = vset.pattern.permute.xlu0 0
    %262 = vperm.xlu0 %261, %v256
    %v263 = vpop.permute.xlu0 %262
    %266 = vset.pattern.permute.xlu0 0
    %267 = vperm.xlu0 %266, %v257
    %v268 = vpop.permute.xlu0 %267
    %v270 = vmul.f32 %v263, %v258
    %v271 = vmul.f32 %v268, %v259
    %v272 = vsel %vm61, %v270, 0.0
    %v273 = vrot.slane %v272, 4
    %v274 = vadd.f32 %v272, %v273
    %v275 = vrot.slane %v274, 2
    %v276 = vadd.f32 %v274, %v275
    %v277 = vrot.slane %v276, 1
    %v278 = vadd.f32 %v276, %v277
    %v279 = vsel %vm61, %v271, 0.0
    %v280 = vrot.slane %v279, 4
    %v281 = vadd.f32 %v279, %v280
    %v282 = vrot.slane %v281, 2
    %v283 = vadd.f32 %v281, %v282
    %v284 = vrot.slane %v283, 1
    %v285 = vadd.f32 %v283, %v284
    %286 = vset.pattern.permute.xlu0 1
    %287 = vperm.xlu0 %286, %v256
    %v288 = vpop.permute.xlu0 %287
    %290 = vset.pattern.permute.xlu0 1
    %291 = vperm.xlu0 %290, %v257
    %v292 = vpop.permute.xlu0 %291
    %v294 = vmul.f32 %v288, %v258
    %v295 = vmul.f32 %v292, %v259
    %v296 = vsel %vm61, %v294, 0.0
    %v297 = vrot.slane %v296, 4
    %v298 = vadd.f32 %v296, %v297
    %v299 = vrot.slane %v298, 2
    %v300 = vadd.f32 %v298, %v299
    %v301 = vrot.slane %v300, 1
    %v302 = vadd.f32 %v300, %v301
    %v303 = vsel %vm61, %v295, 0.0
    %v304 = vrot.slane %v303, 4
    %v305 = vadd.f32 %v303, %v304
    %v306 = vrot.slane %v305, 2
    %v307 = vadd.f32 %v305, %v306
    %v308 = vrot.slane %v307, 1
    %v309 = vadd.f32 %v307, %v308
    %vm312 = vcmask 1041409
    %v313 = vsel %vm312, %v285, %v278
    %v317 = vsel %vm312, %v309, %v302
    %318 = vrot.lane.b32.xlu0 %v317, 32
    %v319 = vpop.permute.xlu0 %318
    %v321 = vsel %vm61, %v313, %v319
    %v322 = vpack.c.bf16 %v321, %v321
    %v323 = vld [vmem:[%s6] sm:$0xf]
    %v324 = vld [vmem:[%s6 + $0x4] sm:$0xf]
    %v325 = vld [vmem:[%s6 + $0x8] sm:$0xf]
    %v326 = vld [vmem:[%s6 + $0xc] sm:$0xf]
    %v327 = vld [vmem:[%s6 + $0x10] sm:$0xf]
    %v328 = vld [vmem:[%s6 + $0x14] sm:$0xf]
    %v329 = vld [vmem:[%s6 + $0x18] sm:$0xf]
    %v330 = vld [vmem:[%s6 + $0x1c] sm:$0xf]
    %v331 = vld [vmem:[%s7] sm:$0x1]
    %v333 = vlaneseq
    %v334 = vshrl.u32 %v333, 7
    %v335 = vsub.s32 0, %v334
    %v336 = vrot.slane %v331, %v335
    %v346 = vunpack.c.l.b16 %v323
    %v347 = vunpack.c.l.b16 %v324
    %v348 = vunpack.c.l.b16 %v325
    %v349 = vunpack.c.l.b16 %v326
    %v350 = vunpack.c.l.b16 %v327
    %v351 = vunpack.c.l.b16 %v328
    %v352 = vunpack.c.l.b16 %v329
    %v353 = vunpack.c.l.b16 %v330
    %v354 = vpack.c.b16 %v347, %v346
    %v355 = vpack.c.b16 %v349, %v348
    %v356 = vpack.c.b16 %v351, %v350
    %v357 = vpack.c.b16 %v353, %v352
    %v363 = vsel %vm123, %v322, 0
    %365 = vmatprep.subr.bf16.mxu0 0
    %366 = vmatpush1.bf16.msra.mxu0 0
    %367 = vmatprep.subr.bf16.mxu0 0
    %368 = vmatpush1.bf16.msra.mxu0 0
    %369 = vmatprep.subr.bf16.mxu0 0
    %370 = vmatpush1.bf16.msra.mxu0 0
    %371 = vmatprep.subr.bf16.mxu0 0
    %372 = vmatpush1.bf16.msra.mxu0 0
    %373 = vmatprep.subr.bf16.mxu0 0
    %374 = vmatpush1.bf16.msra.mxu0 %v357
    %375 = vmatprep.subr.bf16.mxu0 0
    %376 = vmatpush1.bf16.msra.mxu0 %v356
    %377 = vmatprep.subr.bf16.mxu0 0
    %378 = vmatpush1.bf16.msra.mxu0 %v355
    %379 = vmatprep.subr.bf16.mxu0 0
    %380 = vmatpush1.bf16.msra.mxu0 %v354
    %381 = vmatprep.subr.bf16.mxu0 0
    %382 = vmatpush2.bf16.msra.mxu0 0
    %383 = vmatprep.subr.bf16.mxu0 0
    %384 = vmatpush2.bf16.msra.mxu0 0
    %385 = vmatprep.subr.bf16.mxu0 0
    %386 = vmatpush2.bf16.msra.mxu0 0
    %387 = vmatprep.subr.bf16.mxu0 0
    %388 = vmatpush2.bf16.msra.mxu0 0
    %389 = vmatprep.subr.bf16.mxu0 0
    %390 = vmatpush2.bf16.msra.mxu0 0
    %391 = vmatprep.subr.bf16.mxu0 0
    %392 = vmatpush2.bf16.msra.mxu0 0
    %393 = vmatprep.subr.bf16.mxu0 0
    %394 = vmatpush2.bf16.msra.mxu0 0
    %395 = vmatprep.subr.bf16.mxu0 0
    %396 = vmatpush2.bf16.msra.mxu0 0
    %397 = vmatprep.mubr.bf16.mxu0 0
    %398 = vmatmul.mubr.bf16.gmra.mxu0 %v363
    %v399 = vpop.f32.mrf.mxu0
    %v400 = vadd.f32 %v336, %v399
    %v401 = vpop.f32.mrf.mxu0
    %v402 = vpop.f32.mrf.mxu0
    %v403 = vpop.f32.mrf.mxu0
    %404 = vdwg.mxu0
    %405 = vst [vmem:[#allocation2] sm:$0x3] %v400
    // Predicated region
    $region34: #{tpu_custom_call.1} parent=1 // pred_check
      _
    $region35: #{tpu_custom_call.1} parent=1 // pred_check_branch
      %407 = sbr.rel (0) target = $region37
    $region36: #{tpu_custom_call.1} parent=1 // pred_region
      %s409 = ssub.s32 32, 32
      %410 = vsyncadd [#allocation3], %s409
      %s412 = sshll.u32 [#allocation2], 4
      %s413 = int_to_ptr.vmem [resolvable:$true] %s412
      %415 = dma.vmem_to_hbm [thread:$0]  %s413, 32, %s8, [#allocation3]
    $region37: #{tpu_custom_call.1} parent=1 // pred_fallthru
      _
    // Predicated region
    $region38: #{tpu_custom_call.1} parent=1 // pred_check
      _
    $region39: #{tpu_custom_call.1} parent=1 // pred_check_branch
      %417 = sbr.rel (0) target = $region41
    $region40: #{tpu_custom_call.1} parent=1 // pred_region
      %418 = dma.done [#allocation3], 32
    $region41: #{tpu_custom_call.1} parent=1 // pred_fallthru
      _
    %419 = vsyncpa [#allocation3], 1

</llo_original>
